<compile_context>
chip_gen: v7x
topology: tpu7x:2x2x1
jax: 0.10.0
libtpu: 0.0.40
codegen_flags: <defaults>
</compile_context>

<pallas_src>
import functools
import math

import jax
import jax.numpy as jnp
from jax import lax
from jax.experimental import pallas as pl
from jax.experimental.pallas import tpu as pltpu


def _flash_sdp_kernel(scale, q_ref, k_ref, v_ref, m_ref, o_ref,
                      m_sc, l_sc, acc_sc):
    # Per-grid-step views (batch dim squeezed out by the BlockSpecs):
    #   q_ref: (tq, D), k_ref: (tk, D), v_ref: (tk, Dv), m_ref: (1, tk)
    kv = pl.program_id(2)

    @pl.when(kv == 0)
    def _init():
        m_sc[...] = jnp.full_like(m_sc, -jnp.inf)
        l_sc[...] = jnp.zeros_like(l_sc)
        acc_sc[...] = jnp.zeros_like(acc_sc)

    q = q_ref[...]                               # (tq, D)  native dtype -> MXU
    k = k_ref[...]                               # (tk, D)
    v = v_ref[...]                               # (tk, Dv)
    bias = m_ref[...].astype(jnp.float32)        # (1, tk)

    # scores = Q @ K^T, contracting the last dims directly (no k.T relayout).
    s = lax.dot_general(q, k, (((1,), (1,)), ((), ())),
                        preferred_element_type=jnp.float32)   # (tq, tk)
    # 1/sqrt(d_k) + additive mask (mask broadcasts over query rows).
    s = s * scale + bias

    # Online (streaming) softmax update.
    m_prev = m_sc[...]                                          # (tq, 1)
    m_new = jnp.maximum(m_prev, jnp.max(s, axis=-1, keepdims=True))
    alpha = jnp.exp(m_prev - m_new)                             # rescale factor
    p = jnp.exp(s - m_new)                                      # (tq, tk)
    l_sc[...] = alpha * l_sc[...] + jnp.sum(p, axis=-1, keepdims=True)
    acc_sc[...] = alpha * acc_sc[...] + jnp.dot(
        p.astype(v.dtype), v, preferred_element_type=jnp.float32)
    m_sc[...] = m_new

    @pl.when(kv == pl.num_programs(2) - 1)
    def _finalize():
        # Exact normalization: a tiny (tq, 1) divide at finalize time.
        inv_l = 1.0 / l_sc[...]
        o_ref[...] = (acc_sc[...] * inv_l).astype(o_ref.dtype)


def _pick_tile(dim, preferred=(256, 128)):
    """Largest MXU-friendly tile that divides `dim`; else use the full extent."""
    for t in preferred:
        if dim >= t and dim % t == 0:
            return t
    return dim


def scaled_dot_product(queries, keys, values, masks, key_dimension):
    """Pallas equivalent of ScaledDotProduct.forward."""
    B, Sq, D = queries.shape
    _, Sk, Dv = values.shape
    assert keys.shape == (B, Sk, D)
    assert masks.shape == (B, Sk)
    # NOTE: the PyTorch module's mask expand implicitly assumes Sq == Sk
    # (self-attention); the kernel itself only needs the broadcast over rows.

    scale = 1.0 / math.sqrt(key_dimension)
    masks3 = masks.reshape(B, 1, Sk)  # glue reshape so the mask block is 3-D

    tq = _pick_tile(Sq)
    tk = _pick_tile(Sk)
    grid = (B, pl.cdiv(Sq, tq), pl.cdiv(Sk, tk))

    # Rough VMEM budget (f32 upper bound): 2x-buffered tiles + scratch + slack.
    itemsize = 4
    vmem_est = itemsize * (2 * (tq * D + tk * D + tk * Dv + tk + tq * Dv)
                           + tq * (Dv + 2)) + (4 << 20)
    vmem_limit = int(min(max(vmem_est, 16 << 20), 64 << 20))

    flops = 2 * B * Sq * Sk * (D + Dv)
    bytes_accessed = (queries.size * queries.dtype.itemsize
                      + keys.size * keys.dtype.itemsize
                      + values.size * values.dtype.itemsize
                      + masks.size * masks.dtype.itemsize
                      + B * Sq * Dv * queries.dtype.itemsize)

    kernel = functools.partial(_flash_sdp_kernel, scale)

    return pl.pallas_call(
        kernel,
        out_shape=jax.ShapeDtypeStruct((B, Sq, Dv), queries.dtype),
        grid_spec=pltpu.PrefetchScalarGridSpec(
            num_scalar_prefetch=0,
            grid=grid,
            in_specs=[
                # batch dim squeezed (None) so the kernel sees 2-D tiles
                pl.BlockSpec((None, tq, D), lambda b, qi, ki: (b, qi, 0)),
                pl.BlockSpec((None, tk, D), lambda b, qi, ki: (b, ki, 0)),
                pl.BlockSpec((None, tk, Dv), lambda b, qi, ki: (b, ki, 0)),
                pl.BlockSpec((None, 1, tk), lambda b, qi, ki: (b, 0, ki)),
            ],
            out_specs=pl.BlockSpec((None, tq, Dv), lambda b, qi, ki: (b, qi, 0)),
            scratch_shapes=[
                pltpu.VMEM((tq, 1), jnp.float32),   # running max m
                pltpu.VMEM((tq, 1), jnp.float32),   # running sum l
                pltpu.VMEM((tq, Dv), jnp.float32),  # running accumulator
            ],
        ),
        compiler_params=pltpu.CompilerParams(
            dimension_semantics=("parallel", "parallel", "arbitrary"),
            vmem_limit_bytes=vmem_limit,
        ),
        cost_estimate=pl.CostEstimate(
            flops=flops,
            transcendentals=B * Sq * Sk,
            bytes_accessed=bytes_accessed,
        ),
    )(queries, keys, values, masks3)


def _reference(queries, keys, values, masks, key_dimension):
    d_k = math.sqrt(key_dimension)
    # HIGHEST precision so the reference matmuls are true f32 on TPU
    # (default TPU precision would otherwise inject bf16-level error).
    scores = jnp.einsum("bqd,bkd->bqk", queries, keys,
                        precision=lax.Precision.HIGHEST) / d_k
    scores = scores + masks[:, None, :]
    p = jax.nn.softmax(scores, axis=-1)
    return jnp.einsum("bqk,bkd->bqd", p, values,
                      precision=lax.Precision.HIGHEST)


if __name__ == "__main__":
    key = jax.random.PRNGKey(0)
    B, S, D = 2, 8, 32  # Sq == Sk == S (required by the module's mask expand)
    kq, kk, kvv, km = jax.random.split(key, 4)

    queries = jax.random.normal(kq, (B, S, D), dtype=jnp.float32)
    keys = jax.random.normal(kk, (B, S, D), dtype=jnp.float32)
    values = jax.random.normal(kvv, (B, S, D), dtype=jnp.float32)
    # additive mask: 0 for visible, -1e9 for masked positions
    masks = jnp.where(
        jax.random.uniform(km, (B, S)) > 0.2, 0.0, -1e9
    ).astype(jnp.float32)

    out = scaled_dot_product(queries, keys, values, masks, key_dimension=D)
    out = jax.block_until_ready(out)

    ref = _reference(queries, keys, values, masks, key_dimension=D)
    assert out.shape == (B, S, D)
    max_err = float(jnp.max(jnp.abs(out - ref)))
    assert jnp.allclose(out, ref, atol=2e-3, rtol=2e-3), (
        f"mismatch vs reference (max abs err {max_err:.3e})")

    print("KERNEL_OK")
</pallas_src>

<mosaic_0001>
module attributes {stable_mosaic.version = 11 : i64} {
  func.func @_flash_sdp_kernel(%arg0: i32, %arg1: i32, %arg2: i32, %arg3: memref<1x8x32xf32, #tpu.memory_space<vmem>>, %arg4: memref<1x8x32xf32, #tpu.memory_space<vmem>>, %arg5: memref<1x8x32xf32, #tpu.memory_space<vmem>>, %arg6: memref<1x1x8xf32, #tpu.memory_space<vmem>>, %arg7: memref<1x8x32xf32, #tpu.memory_space<vmem>>, %arg8: memref<8x1xf32, #tpu.memory_space<vmem>>, %arg9: memref<8x1xf32, #tpu.memory_space<vmem>>, %arg10: memref<8x32xf32, #tpu.memory_space<vmem>>) attributes {dimension_semantics = [#tpu.dimension_semantics<parallel>, #tpu.dimension_semantics<parallel>, #tpu.dimension_semantics<arbitrary>], iteration_bounds = array<i64: 2, 1, 1>, scalar_prefetch = 0 : i64, scratch_operands = 3 : i64, tpu.core_type = #tpu.core_type<tc>, window_params = [{transform_indices = @transform_0, window_bounds = array<i64: 1, 8, 32>}, {transform_indices = @transform_1, window_bounds = array<i64: 1, 8, 32>}, {transform_indices = @transform_2, window_bounds = array<i64: 1, 8, 32>}, {transform_indices = @transform_3, window_bounds = array<i64: 1, 1, 8>}, {transform_indices = @transform_4, window_bounds = array<i64: 1, 8, 32>}]} {
    %c0_i32 = arith.constant 0 : i32
    %0 = arith.cmpi eq, %arg2, %c0_i32 : i32
    %1 = arith.extui %0 : i1 to i32
    %c0_i32_0 = arith.constant 0 : i32
    %2 = arith.cmpi ne, %1, %c0_i32_0 : i32
    scf.if %2 {
      %cst_30 = arith.constant 0xFF800000 : f32
      %41 = vector.broadcast %cst_30 : f32 to vector<8x1xf32>
      %c0_31 = arith.constant 0 : index
      %c0_32 = arith.constant 0 : index
      %42 = vector.load %arg8[%c0_31, %c0_32] : memref<8x1xf32, #tpu.memory_space<vmem>>, vector<8x1xf32>
      tpu.vector_store %arg8[%c0_31, %c0_32], %41 {strides = array<i32>} : memref<8x1xf32, #tpu.memory_space<vmem>>, vector<8x1xf32>,
      %cst_33 = arith.constant 0.000000e+00 : f32
      %43 = vector.broadcast %cst_33 : f32 to vector<8x1xf32>
      %c0_34 = arith.constant 0 : index
      %c0_35 = arith.constant 0 : index
      %44 = vector.load %arg9[%c0_34, %c0_35] : memref<8x1xf32, #tpu.memory_space<vmem>>, vector<8x1xf32>
      tpu.vector_store %arg9[%c0_34, %c0_35], %43 {strides = array<i32>} : memref<8x1xf32, #tpu.memory_space<vmem>>, vector<8x1xf32>,
      %cst_36 = arith.constant 0.000000e+00 : f32
      %45 = vector.broadcast %cst_36 : f32 to vector<8x32xf32>
      %c0_37 = arith.constant 0 : index
      %c0_38 = arith.constant 0 : index
      %46 = vector.load %arg10[%c0_37, %c0_38] : memref<8x32xf32, #tpu.memory_space<vmem>>, vector<8x32xf32>
      tpu.vector_store %arg10[%c0_37, %c0_38], %45 {strides = array<i32>} : memref<8x32xf32, #tpu.memory_space<vmem>>, vector<8x32xf32>,
    } else {
    }
    %c0 = arith.constant 0 : index
    %c0_1 = arith.constant 0 : index
    %c0_2 = arith.constant 0 : index
    %3 = vector.load %arg3[%c0, %c0_1, %c0_2] : memref<1x8x32xf32, #tpu.memory_space<vmem>>, vector<1x8x32xf32>
    %4 = vector.shape_cast %3 : vector<1x8x32xf32> to vector<8x32xf32>
    %c0_3 = arith.constant 0 : index
    %c0_4 = arith.constant 0 : index
    %c0_5 = arith.constant 0 : index
    %5 = vector.load %arg4[%c0_3, %c0_4, %c0_5] : memref<1x8x32xf32, #tpu.memory_space<vmem>>, vector<1x8x32xf32>
    %6 = vector.shape_cast %5 : vector<1x8x32xf32> to vector<8x32xf32>
    %c0_6 = arith.constant 0 : index
    %c0_7 = arith.constant 0 : index
    %c0_8 = arith.constant 0 : index
    %7 = vector.load %arg5[%c0_6, %c0_7, %c0_8] : memref<1x8x32xf32, #tpu.memory_space<vmem>>, vector<1x8x32xf32>
    %8 = vector.shape_cast %7 : vector<1x8x32xf32> to vector<8x32xf32>
    %c0_9 = arith.constant 0 : index
    %c0_10 = arith.constant 0 : index
    %c0_11 = arith.constant 0 : index
    %9 = vector.load %arg6[%c0_9, %c0_10, %c0_11] : memref<1x1x8xf32, #tpu.memory_space<vmem>>, vector<1x1x8xf32>
    %10 = vector.shape_cast %9 : vector<1x1x8xf32> to vector<1x8xf32>
    %cst = arith.constant dense<0.000000e+00> : vector<8x8xf32>
    %11 = tpu.matmul %4, %6, %cst {dimension_numbers = #tpu.dot_dimension_numbers<[1], [1], [0], [0], [0, 0, 1, 0], [], []>} : vector<8x32xf32>, vector<8x32xf32>, vector<8x8xf32> -> vector<8x8xf32>
    %cst_12 = arith.constant 0.176776692 : f32
    %12 = vector.broadcast %cst_12 : f32 to vector<8x8xf32>
    %13 = arith.mulf %11, %12 : vector<8x8xf32>
    %14 = vector.broadcast %10 : vector<1x8xf32> to vector<8x8xf32>
    %15 = arith.addf %13, %14 : vector<8x8xf32>
    %c0_13 = arith.constant 0 : index
    %c0_14 = arith.constant 0 : index
    %16 = vector.load %arg8[%c0_13, %c0_14] : memref<8x1xf32, #tpu.memory_space<vmem>>, vector<8x1xf32>
    %cst_15 = arith.constant dense<0xFF800000> : vector<8xf32>
    %17 = vector.multi_reduction <maximumf>, %15, %cst_15 [1] : vector<8x8xf32> to vector<8xf32>
    %18 = vector.shape_cast %17 : vector<8xf32> to vector<8x1xf32>
    %19 = arith.maximumf %16, %18 : vector<8x1xf32>
    %20 = arith.subf %16, %19 : vector<8x1xf32>
    %21 = math.exp %20 : vector<8x1xf32>
    %22 = vector.broadcast %19 : vector<8x1xf32> to vector<8x8xf32>
    %23 = arith.subf %15, %22 : vector<8x8xf32>
    %24 = math.exp %23 : vector<8x8xf32>
    %c0_16 = arith.constant 0 : index
    %c0_17 = arith.constant 0 : index
    %25 = vector.load %arg9[%c0_16, %c0_17] : memref<8x1xf32, #tpu.memory_space<vmem>>, vector<8x1xf32>
    %26 = arith.mulf %21, %25 : vector<8x1xf32>
    %cst_18 = arith.constant dense<0.000000e+00> : vector<8xf32>
    %27 = vector.multi_reduction <add>, %24, %cst_18 [1] : vector<8x8xf32> to vector<8xf32>
    %28 = vector.shape_cast %27 : vector<8xf32> to vector<8x1xf32>
    %29 = arith.addf %26, %28 : vector<8x1xf32>
    %c0_19 = arith.constant 0 : index
    %c0_20 = arith.constant 0 : index
    %30 = vector.load %arg9[%c0_19, %c0_20] : memref<8x1xf32, #tpu.memory_space<vmem>>, vector<8x1xf32>
    tpu.vector_store %arg9[%c0_19, %c0_20], %29 {strides = array<i32>} : memref<8x1xf32, #tpu.memory_space<vmem>>, vector<8x1xf32>,
    %c0_21 = arith.constant 0 : index
    %c0_22 = arith.constant 0 : index
    %31 = vector.load %arg10[%c0_21, %c0_22] : memref<8x32xf32, #tpu.memory_space<vmem>>, vector<8x32xf32>
    %32 = vector.broadcast %21 : vector<8x1xf32> to vector<8x32xf32>
    %33 = arith.mulf %32, %31 : vector<8x32xf32>
    %cst_23 = arith.constant dense<0.000000e+00> : vector<8x32xf32>
    %34 = tpu.matmul %24, %8, %cst_23 {dimension_numbers = #tpu.dot_dimension_numbers<[1], [0], [0], [1], [0, 0, 1, 1], [], []>} : vector<8x8xf32>, vector<8x32xf32>, vector<8x32xf32> -> vector<8x32xf32>
    %35 = arith.addf %33, %34 : vector<8x32xf32>
    %c0_24 = arith.constant 0 : index
    %c0_25 = arith.constant 0 : index
    %36 = vector.load %arg10[%c0_24, %c0_25] : memref<8x32xf32, #tpu.memory_space<vmem>>, vector<8x32xf32>
    tpu.vector_store %arg10[%c0_24, %c0_25], %35 {strides = array<i32>} : memref<8x32xf32, #tpu.memory_space<vmem>>, vector<8x32xf32>,
    %c0_26 = arith.constant 0 : index
    %c0_27 = arith.constant 0 : index
    %37 = vector.load %arg8[%c0_26, %c0_27] : memref<8x1xf32, #tpu.memory_space<vmem>>, vector<8x1xf32>
    tpu.vector_store %arg8[%c0_26, %c0_27], %19 {strides = array<i32>} : memref<8x1xf32, #tpu.memory_space<vmem>>, vector<8x1xf32>,
    %c0_i32_28 = arith.constant 0 : i32
    %38 = arith.cmpi eq, %arg2, %c0_i32_28 : i32
    %39 = arith.extui %38 : i1 to i32
    %c0_i32_29 = arith.constant 0 : i32
    %40 = arith.cmpi ne, %39, %c0_i32_29 : i32
    scf.if %40 {
      %c0_30 = arith.constant 0 : index
      %c0_31 = arith.constant 0 : index
      %41 = vector.load %arg9[%c0_30, %c0_31] : memref<8x1xf32, #tpu.memory_space<vmem>>, vector<8x1xf32>
      %cst_32 = arith.constant 1.000000e+00 : f32
      %42 = vector.broadcast %cst_32 : f32 to vector<8x1xf32>
      %43 = arith.divf %42, %41 : vector<8x1xf32>
      %c0_33 = arith.constant 0 : index
      %c0_34 = arith.constant 0 : index
      %44 = vector.load %arg10[%c0_33, %c0_34] : memref<8x32xf32, #tpu.memory_space<vmem>>, vector<8x32xf32>
      %45 = vector.broadcast %43 : vector<8x1xf32> to vector<8x32xf32>
      %46 = arith.mulf %44, %45 : vector<8x32xf32>
      %c0_35 = arith.constant 0 : index
      %c0_36 = arith.constant 0 : index
      %c0_37 = arith.constant 0 : index
      %47 = vector.load %arg7[%c0_35, %c0_36, %c0_37] : memref<1x8x32xf32, #tpu.memory_space<vmem>>, vector<1x8x32xf32>
      %48 = vector.shape_cast %47 : vector<1x8x32xf32> to vector<8x32xf32>
      %49 = vector.shape_cast %46 : vector<8x32xf32> to vector<1x8x32xf32>
      tpu.vector_store %arg7[%c0_35, %c0_36, %c0_37], %49 {strides = array<i32>} : memref<1x8x32xf32, #tpu.memory_space<vmem>>, vector<1x8x32xf32>,
    } else {
    }
    return
  }
  func.func @transform_0(%arg0: i32, %arg1: i32, %arg2: i32) -> (i32, i32, i32) {
    %c0_i32 = arith.constant 0 : i32
    %c0_i32_0 = arith.constant 0 : i32
    return %arg0, %arg1, %c0_i32 : i32, i32, i32
  }
  func.func @transform_1(%arg0: i32, %arg1: i32, %arg2: i32) -> (i32, i32, i32) {
    %c0_i32 = arith.constant 0 : i32
    %c0_i32_0 = arith.constant 0 : i32
    return %arg0, %arg2, %c0_i32 : i32, i32, i32
  }
  func.func @transform_2(%arg0: i32, %arg1: i32, %arg2: i32) -> (i32, i32, i32) {
    %c0_i32 = arith.constant 0 : i32
    %c0_i32_0 = arith.constant 0 : i32
    return %arg0, %arg2, %c0_i32 : i32, i32, i32
  }
  func.func @transform_3(%arg0: i32, %arg1: i32, %arg2: i32) -> (i32, i32, i32) {
    %c0_i32 = arith.constant 0 : i32
    %c0_i32_0 = arith.constant 0 : i32
    return %arg0, %c0_i32, %arg2 : i32, i32, i32
  }
  func.func @transform_4(%arg0: i32, %arg1: i32, %arg2: i32) -> (i32, i32, i32) {
    %c0_i32 = arith.constant 0 : i32
    %c0_i32_0 = arith.constant 0 : i32
    return %arg0, %arg1, %c0_i32 : i32, i32, i32
  }
}

</mosaic_0001>

<llo_original>
// kernel: tpu_custom_call.1
$region0: #{tpu_custom_call.1}
  #allocation0 [shape = 'u32[]', space=smem, size = 0x4, offset = 0x4, fixed_abs, tag = 'smem constant byte address 0x4 - core index']
  #allocation1 [shape = 'u32[144,128]{1,0:T(1,128)}', space=vmem, size = 0x12000, scoped, tag = 'internal scratch']
  #allocation2 [shape = 'f32[8,1]{1,0:T(8,128)}', space=vmem, size = 0x1000, scoped, tag = 'scratch operand']
  #allocation3 [shape = 'f32[8,1]{1,0:T(8,128)}', space=vmem, size = 0x1000, scoped, tag = 'scratch operand']
  #allocation4 [shape = 'f32[8,32]{1,0:T(8,128)}', space=vmem, size = 0x1000, scoped, tag = 'scratch operand']
  %s0 = inlined_call_operand.hbm [shape: f32[2,8,32], index: 0, kind: input, shape index: {}]
  %s1 = inlined_call_operand.hbm [shape: f32[2,8,32], index: 1, kind: input, shape index: {}]
  %s2 = inlined_call_operand.hbm [shape: f32[2,8,32], index: 2, kind: input, shape index: {}]
  %s3 = inlined_call_operand.vmem [shape: f32[2,1,8], index: 3, kind: input, shape index: {}]
  %s4 = inlined_call_operand.hbm [shape: f32[2,8,32], index: 4, kind: output, shape index: {}]
  %s5 = sld [smem:[#allocation0]]
  $region69: #{tpu_custom_call.1} parent=0
    _
  %s7 = ssub.s32 1, %s5
  %s8 = scalar_select 0, %s7, %s5
  $region1: #{tpu_custom_call.1} parent=0
    #allocation5 [shape = 'u8[8192]{0}', space=vmem, size = 0x2000, scoped, tag = 'input window, operand 0']
    #allocation6 [shape = 's32[2]{0}', space=sflag, size = 0x8, scoped, tag = 'scoped memory for tpu_custom_call.1']
    #allocation7 [shape = 's32[2]{0}', space=sflag, size = 0x8, scoped, tag = 'scoped memory for tpu_custom_call.1']
    #allocation8 [shape = 'u8[8192]{0}', space=vmem, size = 0x2000, scoped, tag = 'input window, operand 1']
    #allocation9 [shape = 's32[2]{0}', space=sflag, size = 0x8, scoped, tag = 'scoped memory for tpu_custom_call.1']
    #allocation10 [shape = 'u8[8192]{0}', space=vmem, size = 0x2000, scoped, tag = 'input window, operand 2']
    #allocation11 [shape = 'u8[8192]{0}', space=vmem, size = 0x2000, scoped, tag = 'output window, operand 0']
    %9 = vsyncpa [#allocation6], 0
    %s10 = scalar_lea.sflag [#allocation6], 1
    %11 = vsyncpa %s10, 0
    %12 = vsyncpa [#allocation9], 0
    %s13 = scalar_lea.sflag [#allocation9], 1
    %14 = vsyncpa %s13, 0
    %15 = vsyncpa [#allocation7], 0
    %s16 = scalar_lea.sflag [#allocation7], 1
    %17 = vsyncpa %s16, 0
    loop: start=0, step=1, limit=4
    $region2: #{tpu_custom_call.1} parent=1 // loop_pre_header
      _
    $region3: #{tpu_custom_call.1} parent=1 // loop_header
      %s19 = sphi 0, %s23
      %p20 = scmp.ge.s32.totalorder %s19, 4
      %s26 = sphi 0, %s45
      %s27 = sphi 0, %s41
      %s28 = sphi 0, %s37
      %s29 = sphi 0, %s26
      %s30 = sphi 0, %s27
      %s31 = sphi 0, %s28
      %s32 = sphi 0, %s29
      %s33 = sphi 0, %s30
      %s34 = sphi 0, %s31
      %s50 = sphi 0, %s52
      %s53 = sphi 0, %s50
      %s54 = sphi 0, %s53
      %s70 = sphi 0, %s54
      %s78 = sphi 0, %s80
      %s81 = sphi 0, %s78
      %s82 = sphi 0, %s81
      %s98 = sphi 0, %s82
      %s106 = sphi 0, %s108
      %s109 = sphi 0, %s106
      %s110 = sphi 0, %s109
      %s126 = sphi 0, %s110
      %s134 = sphi 0, %s136
      %s137 = sphi 0, %s134
      %s138 = sphi 0, %s137
      %s154 = sphi 0, %s138
      %s162 = sphi 0, %s164
      %s165 = sphi 0, %s162
      %s166 = sphi 0, %s165
      %s182 = sphi 0, %s166
    $region4: #{tpu_custom_call.1} parent=1 // loop_header_branch
      %22 = sbr.rel (%p20) target = $region8
    $region5: #{tpu_custom_call.1} parent=1 // loop_body
      %s24 = ssub.s32 %s19, 1
      %s25 = ssub.s32 %s19, 2
      %s35 = sadd.s32 1, %s28
      %p36 = scmp.ge.s32.totalorder %s35, 1
      %s37 = scalar_select %p36, 0, %s35
      %s38 = sadd.s32 1, %s27
      %s39 = scalar_select %p36, %s38, %s27
      %p40 = scmp.ge.s32.totalorder %s39, 1
      %s41 = scalar_select %p40, 0, %s39
      %s42 = sadd.s32 1, %s26
      %s43 = scalar_select %p40, %s42, %s26
      %p44 = scmp.ge.s32.totalorder %s43, 2
      %s45 = scalar_select %p44, 0, %s43
      %s46 = ssub.s32 %s26, %s45
      %s47 = ssub.s32 %s27, %s41
      %s48 = sor.u32 %s46, %s47
      %p49 = scmp.eq.s32.totalorder %s48, 0
      %s51 = sadd.s32 %s50, 1
      %s52 = scalar_select %p49, %s50, %s51
      %p55 = pneg %p49
      %p56 = scmp.eq.s32.totalorder %s19, 1
      %p57 = por %p55, %p56
      %p58 = scmp.ne.s32.totalorder %s50, %s53
      %p59 = scmp.eq.s32.totalorder %s19, 0
      %p60 = por %p58, %p59
      %p61 = scmp.ne.s32.totalorder %s50, %s53
      %p62 = scmp.eq.s32.totalorder %s24, 1
      %p63 = por %p61, %p62
      %p64 = scmp.ne.s32.totalorder %s53, %s54
      %p65 = scmp.eq.s32.totalorder %s24, 0
      %p66 = por %p64, %p65
      %p67 = scmp.ne.s32.totalorder %s53, %s54
      %p68 = scmp.eq.s32.totalorder %s25, 1
      %p69 = por %p67, %p68
      %p71 = scmp.ne.s32.totalorder %s54, %s70
      %p72 = scmp.eq.s32.totalorder %s25, 0
      %p73 = por %p71, %p72
      %s74 = ssub.s32 %s26, %s45
      %s75 = ssub.s32 %s28, %s37
      %s76 = sor.u32 %s74, %s75
      %p77 = scmp.eq.s32.totalorder %s76, 0
      %s79 = sadd.s32 %s78, 1
      %s80 = scalar_select %p77, %s78, %s79
      %p83 = pneg %p77
      %p84 = scmp.eq.s32.totalorder %s19, 1
      %p85 = por %p83, %p84
      %p86 = scmp.ne.s32.totalorder %s78, %s81
      %p87 = scmp.eq.s32.totalorder %s19, 0
      %p88 = por %p86, %p87
      %p89 = scmp.ne.s32.totalorder %s78, %s81
      %p90 = scmp.eq.s32.totalorder %s24, 1
      %p91 = por %p89, %p90
      %p92 = scmp.ne.s32.totalorder %s81, %s82
      %p93 = scmp.eq.s32.totalorder %s24, 0
      %p94 = por %p92, %p93
      %p95 = scmp.ne.s32.totalorder %s81, %s82
      %p96 = scmp.eq.s32.totalorder %s25, 1
      %p97 = por %p95, %p96
      %p99 = scmp.ne.s32.totalorder %s82, %s98
      %p100 = scmp.eq.s32.totalorder %s25, 0
      %p101 = por %p99, %p100
      %s102 = ssub.s32 %s26, %s45
      %s103 = ssub.s32 %s28, %s37
      %s104 = sor.u32 %s102, %s103
      %p105 = scmp.eq.s32.totalorder %s104, 0
      %s107 = sadd.s32 %s106, 1
      %s108 = scalar_select %p105, %s106, %s107
      %p111 = pneg %p105
      %p112 = scmp.eq.s32.totalorder %s19, 1
      %p113 = por %p111, %p112
      %p114 = scmp.ne.s32.totalorder %s106, %s109
      %p115 = scmp.eq.s32.totalorder %s19, 0
      %p116 = por %p114, %p115
      %p117 = scmp.ne.s32.totalorder %s106, %s109
      %p118 = scmp.eq.s32.totalorder %s24, 1
      %p119 = por %p117, %p118
      %p120 = scmp.ne.s32.totalorder %s109, %s110
      %p121 = scmp.eq.s32.totalorder %s24, 0
      %p122 = por %p120, %p121
      %p123 = scmp.ne.s32.totalorder %s109, %s110
      %p124 = scmp.eq.s32.totalorder %s25, 1
      %p125 = por %p123, %p124
      %p127 = scmp.ne.s32.totalorder %s110, %s126
      %p128 = scmp.eq.s32.totalorder %s25, 0
      %p129 = por %p127, %p128
      %s130 = ssub.s32 %s26, %s45
      %s131 = ssub.s32 %s28, %s37
      %s132 = sor.u32 %s130, %s131
      %p133 = scmp.eq.s32.totalorder %s132, 0
      %s135 = sadd.s32 %s134, 1
      %s136 = scalar_select %p133, %s134, %s135
      %p139 = pneg %p133
      %p140 = scmp.eq.s32.totalorder %s19, 1
      %p141 = por %p139, %p140
      %p142 = scmp.ne.s32.totalorder %s134, %s137
      %p143 = scmp.eq.s32.totalorder %s19, 0
      %p144 = por %p142, %p143
      %p145 = scmp.ne.s32.totalorder %s134, %s137
      %p146 = scmp.eq.s32.totalorder %s24, 1
      %p147 = por %p145, %p146
      %p148 = scmp.ne.s32.totalorder %s137, %s138
      %p149 = scmp.eq.s32.totalorder %s24, 0
      %p150 = por %p148, %p149
      %p151 = scmp.ne.s32.totalorder %s137, %s138
      %p152 = scmp.eq.s32.totalorder %s25, 1
      %p153 = por %p151, %p152
      %p155 = scmp.ne.s32.totalorder %s138, %s154
      %p156 = scmp.eq.s32.totalorder %s25, 0
      %p157 = por %p155, %p156
      %s158 = ssub.s32 %s26, %s45
      %s159 = ssub.s32 %s27, %s41
      %s160 = sor.u32 %s158, %s159
      %p161 = scmp.eq.s32.totalorder %s160, 0
      %s163 = sadd.s32 %s162, 1
      %s164 = scalar_select %p161, %s162, %s163
      %p167 = pneg %p161
      %p168 = scmp.eq.s32.totalorder %s19, 1
      %p169 = por %p167, %p168
      %p170 = scmp.ne.s32.totalorder %s162, %s165
      %p171 = scmp.eq.s32.totalorder %s19, 0
      %p172 = por %p170, %p171
      %p173 = scmp.ne.s32.totalorder %s162, %s165
      %p174 = scmp.eq.s32.totalorder %s24, 1
      %p175 = por %p173, %p174
      %p176 = scmp.ne.s32.totalorder %s165, %s166
      %p177 = scmp.eq.s32.totalorder %s24, 0
      %p178 = por %p176, %p177
      %p179 = scmp.ne.s32.totalorder %s165, %s166
      %p180 = scmp.eq.s32.totalorder %s25, 1
      %p181 = por %p179, %p180
      %p183 = scmp.ne.s32.totalorder %s166, %s182
      %p184 = scmp.eq.s32.totalorder %s25, 0
      %p185 = por %p183, %p184
      %p186 = scmp.le.s32.totalorder 1, %s19
      %p187 = scmp.lt.s32.totalorder %s19, 3
      %p188 = pnand %p186, %p187
      %p189 = pneg %p188
      // Predicated region
      $region9: #{tpu_custom_call.1} parent=5 // pred_check
        _
      $region10: #{tpu_custom_call.1} parent=5 // pred_check_branch
        %191 = sbr.rel (%p188) target = $region12
      $region11: #{tpu_custom_call.1} parent=5 // pred_region
        %s192 = ssub.s32 %s19, 1
      $region12: #{tpu_custom_call.1} parent=5 // pred_fallthru
        _
      %p193 = scmp.lt.s32.totalorder %s19, 2
      // Predicated region
      $region13: #{tpu_custom_call.1} parent=5 // pred_check
        %p194 = pneg %p193
      $region14: #{tpu_custom_call.1} parent=5 // pred_check_branch
        %196 = sbr.rel (%p194) target = $region16
      $region15: #{tpu_custom_call.1} parent=5 // pred_region
        // Predicated region
        $region17: #{tpu_custom_call.1} parent=15 // pred_check
          %p197 = pneg %p60
        $region18: #{tpu_custom_call.1} parent=15 // pred_check_branch
          %199 = sbr.rel (%p197) target = $region20
        $region19: #{tpu_custom_call.1} parent=15 // pred_region
          %s200 = sand.u32 %s50, 1
          %s201 = scalar_lea.sflag [#allocation6], %s200
          %s202 = sand.u32 %s50, 1
          %s203 = smul.addr %s202, 8
          %s204 = scalar_lea.vmem [#allocation5], %s203
          %s206 = ssub.s32 128, 128
          %207 = vsyncadd %s201, %s206
          %s208 = sadd.s32 %s27, %s26
          %s209 = smul.addr %s208, 128
          %s210 = scalar_lea.hbm %s0, %s209
          %s212 = sshll.u32 %s204, 4
          %s213 = int_to_ptr.vmem [resolvable:$true] %s212
          %215 = dma.hbm_to_vmem [thread:$0]  %s210, 128, %s213, %s201
        $region20: #{tpu_custom_call.1} parent=15 // pred_fallthru
          _
        // Predicated region
        $region21: #{tpu_custom_call.1} parent=15 // pred_check
          %p216 = pneg %p88
        $region22: #{tpu_custom_call.1} parent=15 // pred_check_branch
          %218 = sbr.rel (%p216) target = $region24
        $region23: #{tpu_custom_call.1} parent=15 // pred_region
          %s219 = sand.u32 %s19, 1
          %s220 = scalar_lea.sflag [#allocation9], %s219
          %s221 = sand.u32 %s78, 1
          %s222 = smul.addr %s221, 8
          %s223 = scalar_lea.vmem [#allocation8], %s222
          %s225 = ssub.s32 128, 128
          %226 = vsyncadd %s220, %s225
          %s227 = sadd.s32 %s28, %s26
          %s228 = smul.addr %s227, 128
          %s229 = scalar_lea.hbm %s1, %s228
          %s231 = sshll.u32 %s223, 4
          %s232 = int_to_ptr.vmem [resolvable:$true] %s231
          %234 = dma.hbm_to_vmem [thread:$0]  %s229, 128, %s232, %s220
        $region24: #{tpu_custom_call.1} parent=15 // pred_fallthru
          _
        // Predicated region
        $region25: #{tpu_custom_call.1} parent=15 // pred_check
          %p235 = pneg %p116
        $region26: #{tpu_custom_call.1} parent=15 // pred_check_branch
          %237 = sbr.rel (%p235) target = $region28
        $region27: #{tpu_custom_call.1} parent=15 // pred_region
          %s238 = sand.u32 %s19, 1
          %s239 = scalar_lea.sflag [#allocation9], %s238
          %s240 = sand.u32 %s106, 1
          %s241 = smul.addr %s240, 8
          %s242 = scalar_lea.vmem [#allocation10], %s241
          %s244 = ssub.s32 128, 128
          %245 = vsyncadd %s239, %s244
          %s246 = sadd.s32 %s28, %s26
          %s247 = smul.addr %s246, 128
          %s248 = scalar_lea.hbm %s2, %s247
          %s250 = sshll.u32 %s242, 4
          %s251 = int_to_ptr.vmem [resolvable:$true] %s250
          %253 = dma.hbm_to_vmem [thread:$0]  %s248, 128, %s251, %s239
        $region28: #{tpu_custom_call.1} parent=15 // pred_fallthru
          _
        // Predicated region
        $region29: #{tpu_custom_call.1} parent=15 // pred_check
          %p254 = pneg %p144
        $region30: #{tpu_custom_call.1} parent=15 // pred_check_branch
          %256 = sbr.rel (%p254) target = $region32
        $region31: #{tpu_custom_call.1} parent=15 // pred_region
          %p257 = scmp.lt.s32.totalorder %s26, 1
          %s258 = scalar_select %p257, %s26, 1
          %p259 = scmp.lt.s32.totalorder %s28, 0
          %s260 = scalar_select %p259, %s28, 0
          %s261 = sadd.s32 %s260, %s258
          %s262 = scalar_lea.vmem %s3, %s261
        $region32: #{tpu_custom_call.1} parent=15 // pred_fallthru
          _
      $region16: #{tpu_custom_call.1} parent=5 // pred_fallthru
        _
      %p263 = scmp.le.s32.totalorder 1, %s19
      %p264 = scmp.lt.s32.totalorder %s19, 3
      %p265 = pnand %p263, %p264
      %p266 = pneg %p265
      // Predicated region
      $region33: #{tpu_custom_call.1} parent=5 // pred_check
        _
      $region34: #{tpu_custom_call.1} parent=5 // pred_check_branch
        %268 = sbr.rel (%p265) target = $region36
      $region35: #{tpu_custom_call.1} parent=5 // pred_region
        %s269 = ssub.s32 %s19, 1
        %s270 = sand.u32 %s53, 1
        %s271 = scalar_lea.sflag [#allocation6], %s270
        %s272 = sand.u32 %s53, 1
        %s273 = smul.addr %s272, 8
        %s274 = scalar_lea.vmem [#allocation5], %s273
        // Predicated region
        $region37: #{tpu_custom_call.1} parent=35 // pred_check
          %p275 = pneg %p66
        $region38: #{tpu_custom_call.1} parent=35 // pred_check_branch
          %277 = sbr.rel (%p275) target = $region40
        $region39: #{tpu_custom_call.1} parent=35 // pred_region
          %278 = dma.done %s271, 128
        $region40: #{tpu_custom_call.1} parent=35 // pred_fallthru
          _
        %s279 = sand.u32 %s24, 1
        %s280 = scalar_lea.sflag [#allocation9], %s279
        %s281 = sand.u32 %s81, 1
        %s282 = smul.addr %s281, 8
        %s283 = scalar_lea.vmem [#allocation8], %s282
        // Predicated region
        $region41: #{tpu_custom_call.1} parent=35 // pred_check
          %p284 = pneg %p94
        $region42: #{tpu_custom_call.1} parent=35 // pred_check_branch
          %286 = sbr.rel (%p284) target = $region44
        $region43: #{tpu_custom_call.1} parent=35 // pred_region
          %287 = dma.done %s280, 128
        $region44: #{tpu_custom_call.1} parent=35 // pred_fallthru
          _
        %s288 = sand.u32 %s24, 1
        %s289 = scalar_lea.sflag [#allocation9], %s288
        %s290 = sand.u32 %s109, 1
        %s291 = smul.addr %s290, 8
        %s292 = scalar_lea.vmem [#allocation10], %s291
        // Predicated region
        $region45: #{tpu_custom_call.1} parent=35 // pred_check
          %p293 = pneg %p122
        $region46: #{tpu_custom_call.1} parent=35 // pred_check_branch
          %295 = sbr.rel (%p293) target = $region48
        $region47: #{tpu_custom_call.1} parent=35 // pred_region
          %296 = dma.done %s289, 128
        $region48: #{tpu_custom_call.1} parent=35 // pred_fallthru
          _
        %s297 = sand.u32 %s53, 1
        %s298 = scalar_lea.sflag [#allocation6], %s297
        %s299 = sand.u32 %s53, 1
        %s300 = smul.addr %s299, 8
        %s301 = scalar_lea.vmem [#allocation5], %s300
        %p302 = pneg %p66
        %p303 = pneg %p63
        %s304 = sand.u32 %s24, 1
        %s305 = scalar_lea.sflag [#allocation9], %s304
        %s306 = sand.u32 %s81, 1
        %s307 = smul.addr %s306, 8
        %s308 = scalar_lea.vmem [#allocation8], %s307
        %p309 = pneg %p94
        %p310 = pneg %p91
        %s311 = sand.u32 %s24, 1
        %s312 = scalar_lea.sflag [#allocation9], %s311
        %s313 = sand.u32 %s109, 1
        %s314 = smul.addr %s313, 8
        %s315 = scalar_lea.vmem [#allocation10], %s314
        %p316 = pneg %p122
        %p317 = pneg %p119
        %p318 = scmp.lt.s32.totalorder %s29, 1
        %s319 = scalar_select %p318, %s29, 1
        %p320 = scmp.lt.s32.totalorder %s31, 0
        %s321 = scalar_select %p320, %s31, 0
        %s322 = sadd.s32 %s321, %s319
        %s323 = scalar_lea.vmem %s3, %s322
        %p324 = pneg %p150
        %p325 = pneg %p147
        %p326 = pneg %p178
        %p327 = pneg %p175
        %s328 = sand.u32 %s165, 1
        %s329 = scalar_lea.sflag [#allocation7], %s328
        %s330 = sand.u32 %s165, 1
        %s331 = smul.addr %s330, 8
        %s332 = scalar_lea.vmem [#allocation11], %s331
        %p333 = scmp.lt.s32.totalorder %s29, 1
        %s334 = scalar_select %p333, %s29, 1
        %p335 = scmp.lt.s32.totalorder %s31, 0
        %s336 = scalar_select %p335, %s31, 0
        %s337 = sadd.s32 %s336, %s334
        %s338 = scalar_lea.vmem %s3, %s337
        %p339 = scmp.eq.s32.totalorder %s31, 0
        // Predicated region
        $region49: #{tpu_custom_call.1} parent=35 // pred_check
          %p340 = pneg %p339
        $region50: #{tpu_custom_call.1} parent=35 // pred_check_branch
          %342 = sbr.rel (%p340) target = $region52
        $region51: #{tpu_custom_call.1} parent=35 // pred_region
          %vm343 = vcmask 7168
          %344 = vst.msk [vmem:[#allocation2] sm:$0xff] %vm343, -inf
          %345 = vst.msk [vmem:[#allocation3] sm:$0xff] %vm343, 0.0
          %vm346 = vcmask 261120
          %347 = vst.msk [vmem:[#allocation4] sm:$0xff] %vm346, 0.0
        $region52: #{tpu_custom_call.1} parent=35 // pred_fallthru
          _
        %v348 = vld [vmem:[%s274] sm:$0xff]
        %v349 = vld [vmem:[%s283] sm:$0xff]
        %v350 = vld [vmem:[%s292] sm:$0xff]
        %v351 = vld [vmem:[%s338] sm:$0x1]
        %vm352 = vcmask 261120
        %v354 = vsel %vm352, %v348, 0
        %v357 = vsel %vm352, %v349, 0
        %359 = vmatprep.subr.mxu0 0.0
        %360 = vmatpush1.xpose.msra.mxu0 %v357
        %361 = vmatprep.subr.mxu0 0.0
        %362 = vmatpush1.xpose.msra.mxu0 0.0
        %363 = vmatprep.subr.mxu0 0.0
        %364 = vmatpush1.xpose.msra.mxu0 0.0
        %365 = vmatprep.subr.mxu0 0.0
        %366 = vmatpush1.xpose.msra.mxu0 0.0
        %367 = vmatprep.subr.mxu0 0.0
        %368 = vmatpush1.xpose.msra.mxu0 0.0
        %369 = vmatprep.subr.mxu0 0.0
        %370 = vmatpush1.xpose.msra.mxu0 0.0
        %371 = vmatprep.subr.mxu0 0.0
        %372 = vmatpush1.xpose.msra.mxu0 0.0
        %373 = vmatprep.subr.mxu0 0.0
        %374 = vmatpush1.xpose.msra.mxu0 0.0
        %375 = vmatprep.subr.mxu0 0.0
        %376 = vmatpush1.xpose.msra.mxu0 0.0
        %377 = vmatprep.subr.mxu0 0.0
        %378 = vmatpush1.xpose.msra.mxu0 0.0
        %379 = vmatprep.subr.mxu0 0.0
        %380 = vmatpush1.xpose.msra.mxu0 0.0
        %381 = vmatprep.subr.mxu0 0.0
        %382 = vmatpush1.xpose.msra.mxu0 0.0
        %383 = vmatprep.subr.mxu0 0.0
        %384 = vmatpush1.xpose.msra.mxu0 0.0
        %385 = vmatprep.subr.mxu0 0.0
        %386 = vmatpush1.xpose.msra.mxu0 0.0
        %387 = vmatprep.subr.mxu0 0.0
        %388 = vmatpush1.xpose.msra.mxu0 0.0
        %389 = vmatprep.subr.mxu0 0.0
        %390 = vmatpush1.xpose.msra.mxu0 0.0
        %391 = vmatprep.subr.mxu0 0.0
        %392 = vmatpush1.xpose.msra.mxu0 0.0
        %393 = vmatprep.subr.mxu0 0.0
        %394 = vmatpush1.xpose.msra.mxu0 0.0
        %395 = vmatprep.subr.mxu0 0.0
        %396 = vmatpush1.xpose.msra.mxu0 0.0
        %397 = vmatprep.subr.mxu0 0.0
        %398 = vmatpush1.xpose.msra.mxu0 0.0
        %399 = vmatprep.subr.mxu0 0.0
        %400 = vmatpush1.xpose.msra.mxu0 0.0
        %401 = vmatprep.subr.mxu0 0.0
        %402 = vmatpush1.xpose.msra.mxu0 0.0
        %403 = vmatprep.subr.mxu0 0.0
        %404 = vmatpush1.xpose.msra.mxu0 0.0
        %405 = vmatprep.subr.mxu0 0.0
        %406 = vmatpush1.xpose.msra.mxu0 0.0
        %407 = vmatprep.subr.mxu0 0.0
        %408 = vmatpush1.xpose.msra.mxu0 0.0
        %409 = vmatprep.subr.mxu0 0.0
        %410 = vmatpush1.xpose.msra.mxu0 0.0
        %411 = vmatprep.subr.mxu0 0.0
        %412 = vmatpush1.xpose.msra.mxu0 0.0
        %413 = vmatprep.subr.mxu0 0.0
        %414 = vmatpush1.xpose.msra.mxu0 0.0
        %415 = vmatprep.subr.mxu0 0.0
        %416 = vmatpush1.xpose.msra.mxu0 0.0
        %417 = vmatprep.subr.mxu0 0.0
        %418 = vmatpush1.xpose.msra.mxu0 0.0
        %419 = vmatprep.subr.mxu0 0.0
        %420 = vmatpush1.xpose.msra.mxu0 0.0
        %421 = vmatprep.subr.mxu0 0.0
        %422 = vmatpush1.xpose.msra.mxu0 0.0
        %423 = vmatprep.mubr.f32.mxu0 0.0
        %424 = vmatmul.mubr.f32.gmra.mrb[0].mxu0 %v354
        %v425 = vpop.f32.mrb[0].mxu0
        %v426 = vadd.f32 0.0, %v425
        %v427 = vpop.f32.mrb[0].mxu0
        %428 = vdwg.mxu0
        %v429 = vmul.f32 %v426, 0.17677669
        %v431 = vlaneseq
        %v432 = vshrl.u32 %v431, 7
        %v433 = vsub.s32 0, %v432
        %v434 = vrot.slane %v351, %v433
        %v436 = vadd.f32 %v429, %v434
        %v437 = vld [vmem:[#allocation2] sm:$0xff]
        %vm438 = vcmask 64512
        %v439 = vsel %vm438, %v436, -inf
        %440 = vmax.xlane.f32.xlu0 %v439
        %v441 = vpop.xlane.xlu0 %440
        %v442 = vmax.f32 %v437, %v441
        %v443 = vsub.f32 %v437, %v442
        %v444 = vmul.f32 %v443, 1.442695
        %v445 = vpow.pop %v444
        %447 = vset.pattern.permute.xlu0 0
        %448 = vperm.xlu0 %447, %v442
        %v449 = vpop.permute.xlu0 %448
        %v451 = vsub.f32 %v436, %v449
        %v452 = vmul.f32 %v451, 1.442695
        %v453 = vpow.pop %v452
        %v454 = vld [vmem:[#allocation3] sm:$0xff]
        %v455 = vmul.f32 %v445, %v454
        %v456 = vsel %vm438, %v453, 0.0
        %457 = vadd.xlane.f32.xlu0 %v456
        %v458 = vpop.xlane.xlu0 %457
        %v459 = vadd.f32 %v455, %v458
        %vm460 = vcmask 7168
        %461 = vst.msk [vmem:[#allocation3] sm:$0xff] %vm460, %v459
        %v462 = vld [vmem:[#allocation4] sm:$0xff]
        %464 = vset.pattern.permute.xlu0 0
        %465 = vperm.xlu0 %464, %v445
        %v466 = vpop.permute.xlu0 %465
        %v468 = vmul.f32 %v466, %v462
        %v470 = vsel %vm438, %v453, 0
        %472 = vmatprep.subr.mxu0 0.0
        %473 = vmatpush1.msra.mxu0 %v350
        %474 = vmatprep.subr.mxu0 0.0
        %475 = vmatpush1.msra.mxu0 0.0
        %476 = vmatprep.subr.mxu0 0.0
        %477 = vmatpush1.msra.mxu0 0.0
        %478 = vmatprep.subr.mxu0 0.0
        %479 = vmatpush1.msra.mxu0 0.0
        %480 = vmatprep.subr.mxu0 0.0
        %481 = vmatpush1.msra.mxu0 0.0
        %482 = vmatprep.subr.mxu0 0.0
        %483 = vmatpush1.msra.mxu0 0.0
        %484 = vmatprep.subr.mxu0 0.0
        %485 = vmatpush1.msra.mxu0 0.0
        %486 = vmatprep.subr.mxu0 0.0
        %487 = vmatpush1.msra.mxu0 0.0
        %488 = vmatprep.subr.mxu0 0.0
        %489 = vmatpush1.msra.mxu0 0.0
        %490 = vmatprep.subr.mxu0 0.0
        %491 = vmatpush1.msra.mxu0 0.0
        %492 = vmatprep.subr.mxu0 0.0
        %493 = vmatpush1.msra.mxu0 0.0
        %494 = vmatprep.subr.mxu0 0.0
        %495 = vmatpush1.msra.mxu0 0.0
        %496 = vmatprep.subr.mxu0 0.0
        %497 = vmatpush1.msra.mxu0 0.0
        %498 = vmatprep.subr.mxu0 0.0
        %499 = vmatpush1.msra.mxu0 0.0
        %500 = vmatprep.subr.mxu0 0.0
        %501 = vmatpush1.msra.mxu0 0.0
        %502 = vmatprep.subr.mxu0 0.0
        %503 = vmatpush1.msra.mxu0 0.0
        %504 = vmatprep.subr.mxu0 0.0
        %505 = vmatpush1.msra.mxu0 0.0
        %506 = vmatprep.subr.mxu0 0.0
        %507 = vmatpush1.msra.mxu0 0.0
        %508 = vmatprep.subr.mxu0 0.0
        %509 = vmatpush1.msra.mxu0 0.0
        %510 = vmatprep.subr.mxu0 0.0
        %511 = vmatpush1.msra.mxu0 0.0
        %512 = vmatprep.subr.mxu0 0.0
        %513 = vmatpush1.msra.mxu0 0.0
        %514 = vmatprep.subr.mxu0 0.0
        %515 = vmatpush1.msra.mxu0 0.0
        %516 = vmatprep.subr.mxu0 0.0
        %517 = vmatpush1.msra.mxu0 0.0
        %518 = vmatprep.subr.mxu0 0.0
        %519 = vmatpush1.msra.mxu0 0.0
        %520 = vmatprep.subr.mxu0 0.0
        %521 = vmatpush1.msra.mxu0 0.0
        %522 = vmatprep.subr.mxu0 0.0
        %523 = vmatpush1.msra.mxu0 0.0
        %524 = vmatprep.subr.mxu0 0.0
        %525 = vmatpush1.msra.mxu0 0.0
        %526 = vmatprep.subr.mxu0 0.0
        %527 = vmatpush1.msra.mxu0 0.0
        %528 = vmatprep.subr.mxu0 0.0
        %529 = vmatpush1.msra.mxu0 0.0
        %530 = vmatprep.subr.mxu0 0.0
        %531 = vmatpush1.msra.mxu0 0.0
        %532 = vmatprep.subr.mxu0 0.0
        %533 = vmatpush1.msra.mxu0 0.0
        %534 = vmatprep.subr.mxu0 0.0
        %535 = vmatpush1.msra.mxu0 0.0
        %536 = vmatprep.mubr.f32.mxu0 0.0
        %537 = vmatmul.mubr.f32.gmra.mrb[0].mxu0 %v470
        %v538 = vpop.f32.mrb[0].mxu0
        %v539 = vadd.f32 0.0, %v538
        %v540 = vpop.f32.mrb[0].mxu0
        %541 = vdwg.mxu0
        %v542 = vadd.f32 %v468, %v539
        %543 = vst.msk [vmem:[#allocation4] sm:$0xff] %vm352, %v542
        %544 = vst.msk [vmem:[#allocation2] sm:$0xff] %vm460, %v442
        // Predicated region
        $region53: #{tpu_custom_call.1} parent=35 // pred_check
          %p545 = pneg %p339
        $region54: #{tpu_custom_call.1} parent=35 // pred_check_branch
          %547 = sbr.rel (%p545) target = $region56
        $region55: #{tpu_custom_call.1} parent=35 // pred_region
          %v548 = vld [vmem:[#allocation3] sm:$0xff]
          %v549 = vrcp.pop %v548
          %v550 = vmul.f32 1.0, %v549
          %v551 = vld [vmem:[#allocation4] sm:$0xff]
          %553 = vset.pattern.permute.xlu0 0
          %554 = vperm.xlu0 %553, %v550
          %v555 = vpop.permute.xlu0 %554
          %v557 = vmul.f32 %v551, %v555
          %558 = vst.msk [vmem:[%s332] sm:$0xff] %vm352, %v557
        $region56: #{tpu_custom_call.1} parent=35 // pred_fallthru
          _
        %s559 = sand.u32 %s165, 1
        %s560 = scalar_lea.sflag [#allocation7], %s559
        %s561 = sand.u32 %s165, 1
        %s562 = smul.addr %s561, 8
        %s563 = scalar_lea.vmem [#allocation11], %s562
        // Predicated region
        $region57: #{tpu_custom_call.1} parent=35 // pred_check
          %p564 = pneg %p175
        $region58: #{tpu_custom_call.1} parent=35 // pred_check_branch
          %566 = sbr.rel (%p564) target = $region60
        $region59: #{tpu_custom_call.1} parent=35 // pred_region
          %s568 = ssub.s32 128, 128
          %569 = vsyncadd %s560, %s568
          %s570 = sadd.s32 %s30, %s29
          %s571 = smul.addr %s570, 128
          %s572 = scalar_lea.hbm %s4, %s571
          %s574 = sshll.u32 %s563, 4
          %s575 = int_to_ptr.vmem [resolvable:$true] %s574
          %577 = dma.vmem_to_hbm [thread:$0]  %s575, 128, %s572, %s560
        $region60: #{tpu_custom_call.1} parent=35 // pred_fallthru
          _
      $region36: #{tpu_custom_call.1} parent=5 // pred_fallthru
        _
      %p578 = scmp.le.s32.totalorder 2, %s19
      // Predicated region
      $region61: #{tpu_custom_call.1} parent=5 // pred_check
        %p579 = pneg %p578
      $region62: #{tpu_custom_call.1} parent=5 // pred_check_branch
        %581 = sbr.rel (%p579) target = $region64
      $region63: #{tpu_custom_call.1} parent=5 // pred_region
        %s582 = ssub.s32 %s19, 2
        // Predicated region
        $region65: #{tpu_custom_call.1} parent=63 // pred_check
          %p583 = pneg %p181
        $region66: #{tpu_custom_call.1} parent=63 // pred_check_branch
          %585 = sbr.rel (%p583) target = $region68
        $region67: #{tpu_custom_call.1} parent=63 // pred_region
          %s586 = sand.u32 %s166, 1
          %s587 = scalar_lea.sflag [#allocation7], %s586
          %s588 = sand.u32 %s166, 1
          %s589 = smul.addr %s588, 8
          %s590 = scalar_lea.vmem [#allocation11], %s589
          %591 = dma.done %s587, 128
        $region68: #{tpu_custom_call.1} parent=63 // pred_fallthru
          _
      $region64: #{tpu_custom_call.1} parent=5 // pred_fallthru
        _
    $region6: #{tpu_custom_call.1} parent=1 // loop_footer
      %s23 = sadd.s32 1, %s19
    $region7: #{tpu_custom_call.1} parent=1 // loop_footer_branch
      %18 = sbr.rel target = $region3
    $region8: #{tpu_custom_call.1} parent=1 // loop_exit
      _
    %592 = vsyncpa [#allocation6], 1
    %s593 = scalar_lea.sflag [#allocation6], 1
    %594 = vsyncpa %s593, 1
    %595 = vsyncpa [#allocation9], 1
    %s596 = scalar_lea.sflag [#allocation9], 1
    %597 = vsyncpa %s596, 1
    %598 = vsyncpa [#allocation7], 1
    %s599 = scalar_lea.sflag [#allocation7], 1
    %600 = vsyncpa %s599, 1

</llo_original>
